<compile_context>
chip_gen: v5e
topology: v5e:2x2
jax: 0.10.0
libtpu: 0.0.40
codegen_flags: <defaults>
</compile_context>

<pallas_src>
import functools

import jax
import jax.numpy as jnp
from jax.experimental import pallas as pl
from jax.experimental.pallas import tpu as pltpu


# ----------------------------- hparams ------------------------------------- #
class HParams:
  ext_input_dim = 4
  co_dim = 4
  gen_dim = 32
  fac_dim = 8
  con_dim = 16
  ci_enc_dim = 8
  cell_clip = 5.0
  dropout_rate = 0.0   # dropout (gen_state_drop) is identity at inference


# --------------------- packed parameter prep (run once) --------------------- #
def prepare_packed_params(params, hps):
  """Pre-transpose / pack / pre-normalize all weights, outside the hot path."""
  H = hps.gen_dim
  w_ih = params["w_ih"]                         # [3H, in_dim]
  w_hh = params["w_hh"]                         # [3H, H]
  # GRU biases enter linearly before sigmoid/tanh, so summing the paired
  # input/hidden biases is exact.
  bias = (params["b_ih"] + params["b_hh"]).reshape(1, 3 * H)
  # KernelNormalizedLinear (bias=False): L2-normalize each output unit's
  # weight row once; matches F.normalize(w, p=2, dim=1) with eps=1e-12.
  fw = params["fac_w"]                          # [fac, H]
  fw = fw / jnp.maximum(jnp.sqrt(jnp.sum(fw * fw, axis=1, keepdims=True)), 1e-12)
  return {
      "w_ih_t": w_ih.T,                         # [in_dim, 3H]  (z|r|n lanes)
      "w_hh_zr_t": w_hh[: 2 * H].T,             # [H, 2H]       (z|r lanes)
      "w_hh_n_t": w_hh[2 * H:].T,               # [H, H]
      "bias": bias,                             # [1, 3H]
      "fac_w_t": fw.T,                          # [H, fac]
  }


# --------------------------- shared in-kernel step -------------------------- #
def _gru_factor_step(x, h, w_ih_t, w_hh_zr_t, w_hh_n_t, bias, fac_w_t,
                     *, H, clip):
  """One ClippedGRUCell step + kernel-normalized factor readout."""
  # x_all includes the pre-summed (b_ih + b_hh) biases for all three gates.
  x_all = jnp.dot(x, w_ih_t, preferred_element_type=jnp.float32) + bias
  h_zr = jnp.dot(h, w_hh_zr_t, preferred_element_type=jnp.float32)
  # Single sigmoid over the fused z|r slab, then static lane slices.
  gates = jax.nn.sigmoid(x_all[:, : 2 * H] + h_zr)
  z = gates[:, :H]
  r = gates[:, H:]
  h_n = jnp.dot(r * h, w_hh_n_t, preferred_element_type=jnp.float32)
  n = jnp.tanh(x_all[:, 2 * H:] + h_n)
  new_h = z * h + (1.0 - z) * n
  new_h = jnp.clip(new_h, -clip, clip)
  # Dropout (gen_state_drop) is identity at inference time.
  factor = jnp.dot(new_h, fac_w_t, preferred_element_type=jnp.float32)
  return new_h, factor


def _write_hidden(hid_ref, new_h, mid, gen_input, factor,
                  *, H, mid_w, in_dim, fac):
  hid_ref[:, 0:H] = new_h.astype(hid_ref.dtype)
  hid_ref[:, H:H + mid_w] = mid.astype(hid_ref.dtype)
  hid_ref[:, H + mid_w:H + mid_w + in_dim] = gen_input.astype(hid_ref.dtype)
  off = H + mid_w + in_dim
  hid_ref[:, off:off + fac] = factor.astype(hid_ref.dtype)


# ------------------------------ kernels ------------------------------------- #
def _cell_kernel(gen_in_ref, h0_ref, wih_ref, whzr_ref, whn_ref, bias_ref,
                 facw_ref, hid_ref, *, H, mid_w, in_dim, fac, clip):
  """Single step: writes the full hidden vector [B, H+mid_w+in_dim+fac]."""
  x = gen_in_ref[...]
  h = h0_ref[:, 0:H]
  new_h, factor = _gru_factor_step(
      x, h, wih_ref[...], whzr_ref[...], whn_ref[...], bias_ref[...],
      facw_ref[...], H=H, clip=clip)
  mid = h0_ref[:, H:H + mid_w]          # con_state | co_mean | co_std
  _write_hidden(hid_ref, new_h, mid, x, factor,
                H=H, mid_w=mid_w, in_dim=in_dim, fac=fac)


def _scan_kernel(inp_ref, h0_ref, wih_ref, whzr_ref, whn_ref, bias_ref,
                 facw_ref, hid_ref, gen_scratch, *, H, mid_w, in_dim, fac, clip):
  """Sequence version: grid over T, gen_state carried in VMEM scratch."""
  @pl.when(pl.program_id(0) == 0)
  def _():
    gen_scratch[...] = h0_ref[:, 0:H]

  x = inp_ref[...]                      # [B, in_dim]  (time dim squeezed)
  h = gen_scratch[...]
  new_h, factor = _gru_factor_step(
      x, h, wih_ref[...], whzr_ref[...], whn_ref[...], bias_ref[...],
      facw_ref[...], H=H, clip=clip)
  gen_scratch[...] = new_h
  mid = h0_ref[:, H:H + mid_w]
  _write_hidden(hid_ref, new_h, mid, x, factor,
                H=H, mid_w=mid_w, in_dim=in_dim, fac=fac)


# ------------------------------ wrappers ------------------------------------ #
def _split_gen_input(inp, hps):
  use_con = all([hps.ci_enc_dim > 0, hps.con_dim > 0, hps.co_dim > 0])
  ci_step = inp[..., :hps.co_dim]
  ext_step = inp[..., hps.co_dim:hps.co_dim + hps.ext_input_dim]
  if use_con:
    return jnp.concatenate([ci_step, ext_step], axis=-1)
  return ext_step


def prior_decoder_cell_forward(inp, h_0, packed, hps):
  """Single-step forward, matching PriorDecoderCell.forward."""
  H, mid_w, fac = hps.gen_dim, hps.con_dim + 2 * hps.co_dim, hps.fac_dim
  gen_input = _split_gen_input(inp, hps)
  B, in_dim = gen_input.shape
  out_dim = H + mid_w + in_dim + fac

  vmem = pl.BlockSpec(memory_space=pltpu.MemorySpace.VMEM)
  kernel = functools.partial(_cell_kernel, H=H, mid_w=mid_w, in_dim=in_dim,
                             fac=fac, clip=hps.cell_clip)
  hidden = pl.pallas_call(
      kernel,
      out_shape=jax.ShapeDtypeStruct((B, out_dim), jnp.float32),
      in_specs=[vmem] * 7,
      out_specs=vmem,
  )(gen_input, h_0, packed["w_ih_t"], packed["w_hh_zr_t"], packed["w_hh_n_t"],
    packed["bias"], packed["fac_w_t"])
  return hidden


def prior_decoder_cell_scan(inp_seq, h_0, packed, hps):
  """Run the cell over a [T, B, in] sequence inside ONE pallas_call."""
  H, mid_w, fac = hps.gen_dim, hps.con_dim + 2 * hps.co_dim, hps.fac_dim
  gen_in_seq = _split_gen_input(inp_seq, hps)       # [T, B, in_dim]
  T, B, in_dim = gen_in_seq.shape
  out_dim = H + mid_w + in_dim + fac

  const2d = lambda arr: pl.BlockSpec(arr.shape, lambda t: (0, 0))
  kernel = functools.partial(_scan_kernel, H=H, mid_w=mid_w, in_dim=in_dim,
                             fac=fac, clip=hps.cell_clip)
  hidden_seq = pl.pallas_call(
      kernel,
      grid=(T,),
      out_shape=jax.ShapeDtypeStruct((T, B, out_dim), jnp.float32),
      in_specs=[
          pl.BlockSpec((None, B, in_dim), lambda t: (t, 0, 0)),   # inputs/t
          const2d(h_0),                                           # h_0 (resident)
          const2d(packed["w_ih_t"]),
          const2d(packed["w_hh_zr_t"]),
          const2d(packed["w_hh_n_t"]),
          const2d(packed["bias"]),
          const2d(packed["fac_w_t"]),
      ],
      out_specs=pl.BlockSpec((None, B, out_dim), lambda t: (t, 0, 0)),
      scratch_shapes=[pltpu.VMEM((B, H), jnp.float32)],
      compiler_params=pltpu.CompilerParams(
          dimension_semantics=("arbitrary",)),
  )(gen_in_seq, h_0, packed["w_ih_t"], packed["w_hh_zr_t"],
    packed["w_hh_n_t"], packed["bias"], packed["fac_w_t"])
  return hidden_seq


# ----------------------------- pure-JAX reference --------------------------- #
def _reference_forward(inp, h_0, params, hps):
  gen_dim = hps.gen_dim
  gen_state = h_0[:, :gen_dim]
  con_state = h_0[:, gen_dim:gen_dim + hps.con_dim]
  o = gen_dim + hps.con_dim
  co_mean = h_0[:, o:o + hps.co_dim]
  co_std = h_0[:, o + hps.co_dim:o + 2 * hps.co_dim]

  ci_step = inp[:, :hps.co_dim]
  ext = inp[:, hps.co_dim:hps.co_dim + hps.ext_input_dim]
  gen_input = jnp.concatenate([ci_step, ext], axis=1)

  w_ih, b_ih = params["w_ih"], params["b_ih"]
  w_hh, b_hh = params["w_hh"], params["b_hh"]
  x_all = gen_input @ w_ih.T + b_ih
  x_z, x_r, x_n = jnp.split(x_all, 3, axis=1)
  h_all = gen_state @ w_hh[:2 * gen_dim].T + b_hh[:2 * gen_dim]
  h_z, h_r = jnp.split(h_all, 2, axis=1)
  z = jax.nn.sigmoid(x_z + h_z)
  r = jax.nn.sigmoid(x_r + h_r)
  h_n = (r * gen_state) @ w_hh[2 * gen_dim:].T + b_hh[2 * gen_dim:]
  n = jnp.tanh(x_n + h_n)
  new_h = z * gen_state + (1.0 - z) * n
  new_h = jnp.clip(new_h, -hps.cell_clip, hps.cell_clip)

  w = params["fac_w"]
  normed = w / jnp.maximum(
      jnp.sqrt(jnp.sum(w * w, axis=1, keepdims=True)), 1e-12)
  factor = new_h @ normed.T
  return jnp.concatenate(
      [new_h, con_state, co_mean, co_std, gen_input, factor], axis=1)


# ----------------------------- main ----------------------------------------- #
if __name__ == "__main__":
  hps = HParams()
  B, T = 4, 8
  in_dim = hps.co_dim + hps.ext_input_dim
  h0_dim = (hps.gen_dim + hps.con_dim + 2 * hps.co_dim +
            (hps.co_dim + hps.ext_input_dim) + hps.fac_dim)

  key = jax.random.PRNGKey(0)
  k_in, k_seq, k_h0, k_wih, k_whh, k_bih, k_bhh, k_fw = jax.random.split(key, 8)

  inp = jax.random.normal(k_in, (B, in_dim), dtype=jnp.float32)
  inp_seq = jax.random.normal(k_seq, (T, B, in_dim), dtype=jnp.float32)
  h_0 = jax.random.normal(k_h0, (B, h0_dim), dtype=jnp.float32)

  params = {
      "w_ih": 0.2 * jax.random.normal(k_wih, (3 * hps.gen_dim, in_dim), jnp.float32),
      "w_hh": 0.2 * jax.random.normal(k_whh, (3 * hps.gen_dim, hps.gen_dim), jnp.float32),
      "b_ih": 0.1 * jax.random.normal(k_bih, (3 * hps.gen_dim,), jnp.float32),
      "b_hh": 0.1 * jax.random.normal(k_bhh, (3 * hps.gen_dim,), jnp.float32),
      "fac_w": 0.2 * jax.random.normal(k_fw, (hps.fac_dim, hps.gen_dim), jnp.float32),
  }
  # One-time packing: transposes, z|r|n fusion, bias pre-sum, L2-normalize.
  packed = jax.tree.map(jax.block_until_ready, prepare_packed_params(params, hps))

  # ---- single-step cell (module-parity forward) ----
  out = prior_decoder_cell_forward(inp, h_0, packed, hps)
  out = jax.block_until_ready(out)
  ref = _reference_forward(inp, h_0, params, hps)
  assert out.shape == (B, h0_dim), out.shape
  assert jnp.allclose(out, ref, atol=1e-5, rtol=1e-5), float(
      jnp.max(jnp.abs(out - ref)))

  # ---- fused time-recurrence (T steps in one pallas_call) ----
  out_seq = prior_decoder_cell_scan(inp_seq, h_0, packed, hps)
  out_seq = jax.block_until_ready(out_seq)
  h = h_0
  ref_steps = []
  for t in range(T):
    h = _reference_forward(inp_seq[t], h, params, hps)
    ref_steps.append(h)
  ref_seq = jnp.stack(ref_steps, axis=0)
  assert out_seq.shape == (T, B, h0_dim), out_seq.shape
  assert jnp.allclose(out_seq, ref_seq, atol=1e-5, rtol=1e-5), float(
      jnp.max(jnp.abs(out_seq - ref_seq)))

  print("KERNEL_OK")
</pallas_src>

<mosaic_0001>
module attributes {stable_mosaic.version = 11 : i64} {
  func.func @_cell_kernel(%arg0: memref<4x8xf32, #tpu.memory_space<vmem>>, %arg1: memref<4x72xf32, #tpu.memory_space<vmem>>, %arg2: memref<8x96xf32, #tpu.memory_space<vmem>>, %arg3: memref<32x64xf32, #tpu.memory_space<vmem>>, %arg4: memref<32x32xf32, #tpu.memory_space<vmem>>, %arg5: memref<1x96xf32, #tpu.memory_space<vmem>>, %arg6: memref<32x8xf32, #tpu.memory_space<vmem>>, %arg7: memref<4x72xf32, #tpu.memory_space<vmem>>) attributes {dimension_semantics = [], scalar_prefetch = 0 : i64, scratch_operands = 0 : i64, tpu.core_type = #tpu.core_type<tc>} {
    %c0 = arith.constant 0 : index
    %c0_0 = arith.constant 0 : index
    %0 = vector.load %arg0[%c0, %c0_0] : memref<4x8xf32, #tpu.memory_space<vmem>>, vector<4x8xf32>
    %c0_1 = arith.constant 0 : index
    %c0_2 = arith.constant 0 : index
    %1 = vector.load %arg1[%c0_1, %c0_2] : memref<4x72xf32, #tpu.memory_space<vmem>>, vector<4x32xf32>
    %c0_3 = arith.constant 0 : index
    %c0_4 = arith.constant 0 : index
    %2 = vector.load %arg2[%c0_3, %c0_4] : memref<8x96xf32, #tpu.memory_space<vmem>>, vector<8x96xf32>
    %c0_5 = arith.constant 0 : index
    %c0_6 = arith.constant 0 : index
    %3 = vector.load %arg3[%c0_5, %c0_6] : memref<32x64xf32, #tpu.memory_space<vmem>>, vector<32x64xf32>
    %c0_7 = arith.constant 0 : index
    %c0_8 = arith.constant 0 : index
    %4 = vector.load %arg4[%c0_7, %c0_8] : memref<32x32xf32, #tpu.memory_space<vmem>>, vector<32x32xf32>
    %c0_9 = arith.constant 0 : index
    %c0_10 = arith.constant 0 : index
    %5 = vector.load %arg5[%c0_9, %c0_10] : memref<1x96xf32, #tpu.memory_space<vmem>>, vector<1x96xf32>
    %c0_11 = arith.constant 0 : index
    %c0_12 = arith.constant 0 : index
    %6 = vector.load %arg6[%c0_11, %c0_12] : memref<32x8xf32, #tpu.memory_space<vmem>>, vector<32x8xf32>
    %cst = arith.constant dense<0.000000e+00> : vector<4x96xf32>
    %7 = tpu.matmul %0, %2, %cst {dimension_numbers = #tpu.dot_dimension_numbers<[1], [0], [0], [1], [0, 0, 1, 1], [], []>} : vector<4x8xf32>, vector<8x96xf32>, vector<4x96xf32> -> vector<4x96xf32>
    %8 = vector.broadcast %5 : vector<1x96xf32> to vector<4x96xf32>
    %9 = arith.addf %7, %8 : vector<4x96xf32>
    %cst_13 = arith.constant dense<0.000000e+00> : vector<4x64xf32>
    %10 = tpu.matmul %1, %3, %cst_13 {dimension_numbers = #tpu.dot_dimension_numbers<[1], [0], [0], [1], [0, 0, 1, 1], [], []>} : vector<4x32xf32>, vector<32x64xf32>, vector<4x64xf32> -> vector<4x64xf32>
    %11 = vector.extract_strided_slice %9 {offsets = [0, 0], sizes = [4, 64], strides = [1, 1]} : vector<4x96xf32> to vector<4x64xf32>
    %12 = arith.addf %11, %10 : vector<4x64xf32>
    %13 = arith.negf %12 : vector<4x64xf32>
    %14 = math.exp %13 : vector<4x64xf32>
    %cst_14 = arith.constant 1.000000e+00 : f32
    %15 = vector.broadcast %cst_14 : f32 to vector<4x64xf32>
    %16 = arith.addf %15, %14 : vector<4x64xf32>
    %17 = arith.divf %15, %16 : vector<4x64xf32>
    %18 = vector.extract_strided_slice %17 {offsets = [0, 0], sizes = [4, 32], strides = [1, 1]} : vector<4x64xf32> to vector<4x32xf32>
    %19 = vector.extract_strided_slice %17 {offsets = [0, 32], sizes = [4, 32], strides = [1, 1]} : vector<4x64xf32> to vector<4x32xf32>
    %20 = arith.mulf %19, %1 : vector<4x32xf32>
    %cst_15 = arith.constant dense<0.000000e+00> : vector<4x32xf32>
    %21 = tpu.matmul %20, %4, %cst_15 {dimension_numbers = #tpu.dot_dimension_numbers<[1], [0], [0], [1], [0, 0, 1, 1], [], []>} : vector<4x32xf32>, vector<32x32xf32>, vector<4x32xf32> -> vector<4x32xf32>
    %22 = vector.extract_strided_slice %9 {offsets = [0, 64], sizes = [4, 32], strides = [1, 1]} : vector<4x96xf32> to vector<4x32xf32>
    %23 = arith.addf %22, %21 : vector<4x32xf32>
    %24 = math.tanh %23 : vector<4x32xf32>
    %25 = arith.mulf %18, %1 : vector<4x32xf32>
    %cst_16 = arith.constant 1.000000e+00 : f32
    %26 = vector.broadcast %cst_16 : f32 to vector<4x32xf32>
    %27 = arith.subf %26, %18 : vector<4x32xf32>
    %28 = arith.mulf %27, %24 : vector<4x32xf32>
    %29 = arith.addf %25, %28 : vector<4x32xf32>
    %cst_17 = arith.constant -5.000000e+00 : f32
    %cst_18 = arith.constant 5.000000e+00 : f32
    %30 = vector.broadcast %cst_17 : f32 to vector<4x32xf32>
    %31 = arith.maximumf %30, %29 : vector<4x32xf32>
    %32 = vector.broadcast %cst_18 : f32 to vector<4x32xf32>
    %33 = arith.minimumf %32, %31 : vector<4x32xf32>
    %cst_19 = arith.constant dense<0.000000e+00> : vector<4x8xf32>
    %34 = tpu.matmul %33, %6, %cst_19 {dimension_numbers = #tpu.dot_dimension_numbers<[1], [0], [0], [1], [0, 0, 1, 1], [], []>} : vector<4x32xf32>, vector<32x8xf32>, vector<4x8xf32> -> vector<4x8xf32>
    %c0_20 = arith.constant 0 : index
    %c32 = arith.constant 32 : index
    %35 = vector.load %arg1[%c0_20, %c32] : memref<4x72xf32, #tpu.memory_space<vmem>>, vector<4x24xf32>
    %c0_21 = arith.constant 0 : index
    %c0_22 = arith.constant 0 : index
    %36 = vector.load %arg7[%c0_21, %c0_22] : memref<4x72xf32, #tpu.memory_space<vmem>>, vector<4x32xf32>
    tpu.vector_store %arg7[%c0_21, %c0_22], %33 {strides = array<i32>} : memref<4x72xf32, #tpu.memory_space<vmem>>, vector<4x32xf32>,
    %c0_23 = arith.constant 0 : index
    %c32_24 = arith.constant 32 : index
    %37 = vector.load %arg7[%c0_23, %c32_24] : memref<4x72xf32, #tpu.memory_space<vmem>>, vector<4x24xf32>
    tpu.vector_store %arg7[%c0_23, %c32_24], %35 {strides = array<i32>} : memref<4x72xf32, #tpu.memory_space<vmem>>, vector<4x24xf32>,
    %c0_25 = arith.constant 0 : index
    %c56 = arith.constant 56 : index
    %38 = vector.load %arg7[%c0_25, %c56] : memref<4x72xf32, #tpu.memory_space<vmem>>, vector<4x8xf32>
    tpu.vector_store %arg7[%c0_25, %c56], %0 {strides = array<i32>} : memref<4x72xf32, #tpu.memory_space<vmem>>, vector<4x8xf32>,
    %c0_26 = arith.constant 0 : index
    %c64 = arith.constant 64 : index
    %39 = vector.load %arg7[%c0_26, %c64] : memref<4x72xf32, #tpu.memory_space<vmem>>, vector<4x8xf32>
    tpu.vector_store %arg7[%c0_26, %c64], %34 {strides = array<i32>} : memref<4x72xf32, #tpu.memory_space<vmem>>, vector<4x8xf32>,
    return
  }
}

</mosaic_0001>

<llo_original>
// kernel: tpu_custom_call.1
$region0: #{tpu_custom_call.1}
  #allocation0 [shape = 'u32[]', space=smem, size = 0x4, offset = 0x4, fixed_abs, tag = 'smem constant byte address 0x4 - core index']
  #allocation1 [shape = 'u32[72,128]{1,0:T(1,128)}', space=vmem, size = 0x9000, scoped, tag = 'internal scratch']
  %s0 = inlined_call_operand.hbm [shape: f32[4,8], index: 0, kind: input, shape index: {}]
  %s1 = inlined_call_operand.hbm [shape: f32[4,72], index: 1, kind: input, shape index: {}]
  %s2 = inlined_call_operand.vmem [shape: f32[8,96], index: 2, kind: input, shape index: {}]
  %s3 = inlined_call_operand.vmem [shape: f32[32,64], index: 3, kind: input, shape index: {}]
  %s4 = inlined_call_operand.hbm [shape: f32[32,32], index: 4, kind: input, shape index: {}]
  %s5 = inlined_call_operand.vmem [shape: f32[1,96], index: 5, kind: input, shape index: {}]
  %s6 = inlined_call_operand.vmem [shape: f32[32,8], index: 6, kind: input, shape index: {}]
  %s7 = inlined_call_operand.hbm [shape: f32[4,72], index: 7, kind: output, shape index: {}]
  %s8 = sld [smem:[#allocation0]]
  $region50: #{tpu_custom_call.1} parent=0
    _
  %s10 = ssub.s32 1, %s8
  %s11 = scalar_select 0, %s10, %s8
  $region1: #{tpu_custom_call.1} parent=0
    #allocation2 [shape = 'u8[2048]{0}', space=vmem, size = 0x800, scoped, tag = 'input window, operand 0, single buffered']
    #allocation3 [shape = 's32[1]{0}', space=sflag, size = 0x4, scoped, tag = 'scoped memory for tpu_custom_call.1']
    #allocation4 [shape = 's32[1]{0}', space=sflag, size = 0x4, scoped, tag = 'scoped memory for tpu_custom_call.1']
    #allocation5 [shape = 'u8[2048]{0}', space=vmem, size = 0x800, scoped, tag = 'input window, operand 1, single buffered']
    #allocation6 [shape = 's32[1]{0}', space=sflag, size = 0x4, scoped, tag = 'scoped memory for tpu_custom_call.1']
    #allocation7 [shape = 'u8[16384]{0}', space=vmem, size = 0x4000, scoped, tag = 'input window, operand 4, single buffered']
    #allocation8 [shape = 'u8[2048]{0}', space=vmem, size = 0x800, scoped, tag = 'output window, operand 0, single buffered']
    %12 = vsyncpa [#allocation3], 0
    %13 = vsyncpa [#allocation6], 0
    %14 = vsyncpa [#allocation4], 0
    // Predicated region
    $region2: #{tpu_custom_call.1} parent=1 // pred_check
      _
    $region3: #{tpu_custom_call.1} parent=1 // pred_check_branch
      %16 = sbr.rel (0) target = $region5
    $region4: #{tpu_custom_call.1} parent=1 // pred_region
      %18 = vsyncadd [#allocation3], 0
      %s20 = sshll.u32 %s0, 4
      %s21 = int_to_ptr.hbm [resolvable:$true] %s20
      %s22 = sshll.u32 [#allocation2], 4
      %s23 = int_to_ptr.vmem [resolvable:$true] %s22
      %25 = dma.hbm_to_vmem [thread:$0]  %s21, 64, %s23, [#allocation3]
    $region5: #{tpu_custom_call.1} parent=1 // pred_fallthru
      _
    // Predicated region
    $region6: #{tpu_custom_call.1} parent=1 // pred_check
      _
    $region7: #{tpu_custom_call.1} parent=1 // pred_check_branch
      %27 = sbr.rel (0) target = $region9
    $region8: #{tpu_custom_call.1} parent=1 // pred_region
      %29 = vsyncadd [#allocation6], 0
      %s31 = sshll.u32 %s1, 4
      %s32 = int_to_ptr.hbm [resolvable:$true] %s31
      %s33 = sshll.u32 [#allocation5], 4
      %s34 = int_to_ptr.vmem [resolvable:$true] %s33
      %36 = dma.hbm_to_vmem [thread:$0]  %s32, 64, %s34, [#allocation6]
    $region9: #{tpu_custom_call.1} parent=1 // pred_fallthru
      _
    // Predicated region
    $region10: #{tpu_custom_call.1} parent=1 // pred_check
      _
    $region11: #{tpu_custom_call.1} parent=1 // pred_check_branch
      %38 = sbr.rel (0) target = $region13
    $region12: #{tpu_custom_call.1} parent=1 // pred_region
      _
    $region13: #{tpu_custom_call.1} parent=1 // pred_fallthru
      _
    // Predicated region
    $region14: #{tpu_custom_call.1} parent=1 // pred_check
      _
    $region15: #{tpu_custom_call.1} parent=1 // pred_check_branch
      %40 = sbr.rel (0) target = $region17
    $region16: #{tpu_custom_call.1} parent=1 // pred_region
      _
    $region17: #{tpu_custom_call.1} parent=1 // pred_fallthru
      _
    // Predicated region
    $region18: #{tpu_custom_call.1} parent=1 // pred_check
      _
    $region19: #{tpu_custom_call.1} parent=1 // pred_check_branch
      %42 = sbr.rel (0) target = $region21
    $region20: #{tpu_custom_call.1} parent=1 // pred_region
      %44 = vsyncadd [#allocation6], 0
      %s45 = sshll.u32 %s4, 4
      %s46 = int_to_ptr.hbm [resolvable:$true] %s45
      %s47 = sshll.u32 [#allocation7], 4
      %s48 = int_to_ptr.vmem [resolvable:$true] %s47
      %53 = dma.hbm_to_vmem [thread:$0]  %s46, 512, %s48, [#allocation6], 128, 128, 8
    $region21: #{tpu_custom_call.1} parent=1 // pred_fallthru
      _
    // Predicated region
    $region22: #{tpu_custom_call.1} parent=1 // pred_check
      _
    $region23: #{tpu_custom_call.1} parent=1 // pred_check_branch
      %55 = sbr.rel (0) target = $region25
    $region24: #{tpu_custom_call.1} parent=1 // pred_region
      _
    $region25: #{tpu_custom_call.1} parent=1 // pred_fallthru
      _
    // Predicated region
    $region26: #{tpu_custom_call.1} parent=1 // pred_check
      _
    $region27: #{tpu_custom_call.1} parent=1 // pred_check_branch
      %57 = sbr.rel (0) target = $region29
    $region28: #{tpu_custom_call.1} parent=1 // pred_region
      _
    $region29: #{tpu_custom_call.1} parent=1 // pred_fallthru
      _
    // Predicated region
    $region30: #{tpu_custom_call.1} parent=1 // pred_check
      _
    $region31: #{tpu_custom_call.1} parent=1 // pred_check_branch
      %59 = sbr.rel (0) target = $region33
    $region32: #{tpu_custom_call.1} parent=1 // pred_region
      %61 = dma.done [#allocation3], 64
    $region33: #{tpu_custom_call.1} parent=1 // pred_fallthru
      _
    // Predicated region
    $region34: #{tpu_custom_call.1} parent=1 // pred_check
      _
    $region35: #{tpu_custom_call.1} parent=1 // pred_check_branch
      %63 = sbr.rel (0) target = $region37
    $region36: #{tpu_custom_call.1} parent=1 // pred_region
      %65 = dma.done [#allocation6], 64
    $region37: #{tpu_custom_call.1} parent=1 // pred_fallthru
      _
    // Predicated region
    $region38: #{tpu_custom_call.1} parent=1 // pred_check
      _
    $region39: #{tpu_custom_call.1} parent=1 // pred_check_branch
      %67 = sbr.rel (0) target = $region41
    $region40: #{tpu_custom_call.1} parent=1 // pred_region
      %69 = dma.done [#allocation6], 512
    $region41: #{tpu_custom_call.1} parent=1 // pred_fallthru
      _
    %v70 = vld [vmem:[#allocation2] sm:$0xf]
    %v71 = vld [vmem:[#allocation5] sm:$0xf]
    %v72 = vld [vmem:[%s2] sm:$0xff]
    %v73 = vld [vmem:[%s3] sm:$0xff]
    %v74 = vld [vmem:[%s3 + $0x8] sm:$0xff]
    %v75 = vld [vmem:[%s3 + $0x10] sm:$0xff]
    %v76 = vld [vmem:[%s3 + $0x18] sm:$0xff]
    %v77 = vld [vmem:[#allocation7] sm:$0xff]
    %v78 = vld [vmem:[#allocation7 + $0x8] sm:$0xff]
    %v79 = vld [vmem:[#allocation7 + $0x10] sm:$0xff]
    %v80 = vld [vmem:[#allocation7 + $0x18] sm:$0xff]
    %v81 = vld [vmem:[%s5] sm:$0x1]
    %v82 = vld [vmem:[%s6] sm:$0xff]
    %v83 = vld [vmem:[%s6 + $0x8] sm:$0xff]
    %v84 = vld [vmem:[%s6 + $0x10] sm:$0xff]
    %v85 = vld [vmem:[%s6 + $0x18] sm:$0xff]
    %v87 = vperm.slane %v81, 0
    %vm89 = vcmask 64512
    %v91 = vsel %vm89, %v70, 0
    %93 = vmatpush.msra.mxu0 0.0
    %94 = vmatpush.msra.mxu0 0.0
    %95 = vmatpush.msra.mxu0 0.0
    %96 = vmatpush.msra.mxu0 0.0
    %97 = vmatpush.msra.mxu0 0.0
    %98 = vmatpush.msra.mxu0 0.0
    %99 = vmatpush.msra.mxu0 0.0
    %100 = vmatpush.msra.mxu0 0.0
    %101 = vmatpush.msra.mxu0 0.0
    %102 = vmatpush.msra.mxu0 0.0
    %103 = vmatpush.msra.mxu0 0.0
    %104 = vmatpush.msra.mxu0 0.0
    %105 = vmatpush.msra.mxu0 0.0
    %106 = vmatpush.msra.mxu0 0.0
    %107 = vmatpush.msra.mxu0 0.0
    %108 = vmatpush.msra.mxu0 %v72
    %109 = vmatmul.f32.gmra.mxu0 %v91
    %v110 = vpop.f32.mrf.mxu0
    %v111 = vadd.f32 %v87, %v110
    %112 = vdwg.mxu0
    %vm113 = vcmask 261120
    %v115 = vsel %vm113, %v71, 0
    %117 = vmatpush.msra.mxu0 0.0
    %118 = vmatpush.msra.mxu0 0.0
    %119 = vmatpush.msra.mxu0 0.0
    %120 = vmatpush.msra.mxu0 0.0
    %121 = vmatpush.msra.mxu0 0.0
    %122 = vmatpush.msra.mxu0 0.0
    %123 = vmatpush.msra.mxu0 0.0
    %124 = vmatpush.msra.mxu0 0.0
    %125 = vmatpush.msra.mxu0 0.0
    %126 = vmatpush.msra.mxu0 0.0
    %127 = vmatpush.msra.mxu0 0.0
    %128 = vmatpush.msra.mxu0 0.0
    %129 = vmatpush.msra.mxu0 %v76
    %130 = vmatpush.msra.mxu0 %v75
    %131 = vmatpush.msra.mxu0 %v74
    %132 = vmatpush.msra.mxu0 %v73
    %133 = vmatmul.f32.gmra.mxu0 %v115
    %v134 = vpop.f32.mrf.mxu0
    %v135 = vadd.f32 0.0, %v134
    %136 = vdwg.mxu0
    %v137 = vadd.f32 %v111, %v135
    %v138 = vxor.u32 %v137, 2147483648
    %v139 = vmul.f32 %v138, 1.442695
    %v140 = vpow.pop %v139
    %v141 = vadd.f32 %v140, 1.0
    %v142 = vrcp.pop %v141
    %v143 = vmul.f32 %v141, %v142
    %v144 = vsub.f32 1.0, %v143
    %v145 = vmul.f32 %v142, %v144
    %v146 = vadd.f32 %v142, %v145
    %vm147 = vweird.f32 %v141
    %vm148 = vweird.f32 %v142
    %vm149 = vmor %vm147, %vm148
    %v150 = vsel %vm149, %v142, %v146
    %v151 = vand.u32 2147483647, %v141
    %vm152 = vcmp.eq.f32.partialorder %v151, 8.507059e+37
    %v153 = vand.u32 %v141, 2147483648
    %v154 = vor.u32 1.1754944e-38, %v153
    %v155 = vsel %vm152, %v154, %v150
    %v156 = vmul.f32 1.0, %v155
    %157 = vrot.lane.b32.xlu0 %v71, 32
    %v158 = vpop.permute.xlu0 %157
    %v160 = vmul.f32 %v156, %v158
    %162 = vrot.lane.b32.xlu0 %v160, 96
    %v163 = vpop.permute.xlu0 %162
    %v164 = vsel %vm113, %v163, 0
    %166 = vmatpush.msra.mxu0 0.0
    %167 = vmatpush.msra.mxu0 0.0
    %168 = vmatpush.msra.mxu0 0.0
    %169 = vmatpush.msra.mxu0 0.0
    %170 = vmatpush.msra.mxu0 0.0
    %171 = vmatpush.msra.mxu0 0.0
    %172 = vmatpush.msra.mxu0 0.0
    %173 = vmatpush.msra.mxu0 0.0
    %174 = vmatpush.msra.mxu0 0.0
    %175 = vmatpush.msra.mxu0 0.0
    %176 = vmatpush.msra.mxu0 0.0
    %177 = vmatpush.msra.mxu0 0.0
    %178 = vmatpush.msra.mxu0 %v80
    %179 = vmatpush.msra.mxu0 %v79
    %180 = vmatpush.msra.mxu0 %v78
    %181 = vmatpush.msra.mxu0 %v77
    %182 = vmatmul.f32.gmra.mxu0 %v164
    %v183 = vpop.f32.mrf.mxu0
    %v184 = vadd.f32 0.0, %v183
    %185 = vdwg.mxu0
    %187 = vrot.lane.b32.xlu0 %v184, 64
    %v188 = vpop.permute.xlu0 %187
    %v190 = vadd.f32 %v111, %v188
    %v191 = vtanh.pop %v190
    %v192 = vmul.f32 %v156, %v71
    %v193 = vsub.f32 1.0, %v156
    %195 = vrot.lane.b32.xlu0 %v191, 64
    %v196 = vpop.permute.xlu0 %195
    %v198 = vmul.f32 %v193, %v196
    %v199 = vadd.f32 %v192, %v198
    %v200 = vmax.f32 %v199, -5.0
    %v201 = vmin.f32 %v200, 5.0
    %v203 = vsel %vm113, %v201, 0
    %205 = vmatpush.msra.mxu0 0.0
    %206 = vmatpush.msra.mxu0 0.0
    %207 = vmatpush.msra.mxu0 0.0
    %208 = vmatpush.msra.mxu0 0.0
    %209 = vmatpush.msra.mxu0 0.0
    %210 = vmatpush.msra.mxu0 0.0
    %211 = vmatpush.msra.mxu0 0.0
    %212 = vmatpush.msra.mxu0 0.0
    %213 = vmatpush.msra.mxu0 0.0
    %214 = vmatpush.msra.mxu0 0.0
    %215 = vmatpush.msra.mxu0 0.0
    %216 = vmatpush.msra.mxu0 0.0
    %217 = vmatpush.msra.mxu0 %v85
    %218 = vmatpush.msra.mxu0 %v84
    %219 = vmatpush.msra.mxu0 %v83
    %220 = vmatpush.msra.mxu0 %v82
    %221 = vmatmul.f32.gmra.mxu0 %v203
    %v222 = vpop.f32.mrf.mxu0
    %v223 = vadd.f32 0.0, %v222
    %224 = vdwg.mxu0
    %vm225 = vcmask 257024
    %226 = vst.msk [vmem:[#allocation8] sm:$0xf] %vm225, %v201
    %vm227 = vcmask 453888
    %228 = vst.msk [vmem:[#allocation8] sm:$0xf] %vm227, %v71
    %229 = vrot.lane.b32.xlu0 %v70, 56
    %v230 = vpop.permute.xlu0 %229
    %vm232 = vcmask 519616
    %233 = vst.msk [vmem:[#allocation8] sm:$0xf] %vm232, %v230
    %235 = vrot.lane.b32.xlu0 %v223, 64
    %v236 = vpop.permute.xlu0 %235
    %vm238 = vcmask 585216
    %239 = vst.msk [vmem:[#allocation8] sm:$0xf] %vm238, %v236
    // Predicated region
    $region42: #{tpu_custom_call.1} parent=1 // pred_check
      _
    $region43: #{tpu_custom_call.1} parent=1 // pred_check_branch
      %241 = sbr.rel (0) target = $region45
    $region44: #{tpu_custom_call.1} parent=1 // pred_region
      %243 = vsyncadd [#allocation4], 0
      %s245 = sshll.u32 [#allocation8], 4
      %s246 = int_to_ptr.vmem [resolvable:$true] %s245
      %s247 = sshll.u32 %s7, 4
      %s248 = int_to_ptr.hbm [resolvable:$true] %s247
      %250 = dma.vmem_to_hbm [thread:$0]  %s246, 64, %s248, [#allocation4]
    $region45: #{tpu_custom_call.1} parent=1 // pred_fallthru
      _
    // Predicated region
    $region46: #{tpu_custom_call.1} parent=1 // pred_check
      _
    $region47: #{tpu_custom_call.1} parent=1 // pred_check_branch
      %252 = sbr.rel (0) target = $region49
    $region48: #{tpu_custom_call.1} parent=1 // pred_region
      %254 = dma.done [#allocation4], 64
    $region49: #{tpu_custom_call.1} parent=1 // pred_fallthru
      _
    %255 = vsyncpa [#allocation3], 1
    %256 = vsyncpa [#allocation6], 1
    %257 = vsyncpa [#allocation4], 1

</llo_original>
